<compile_context>
chip_gen: v7x
topology: tpu7x:2x2x1
jax: 0.10.0
libtpu: 0.0.40
codegen_flags: <defaults>
</compile_context>

<pallas_src>
import jax
import jax.numpy as jnp
from jax.experimental import pallas as pl
from jax.experimental.pallas import tpu as pltpu

LN_EPS = 1e-5


def band_embed_kernel(x_ref, p_ref, o_ref):
    # x_ref: (nb, C, ts) input pixels
    # p_ref: (E, C+3)    packed params: [W (E,C) | bias | gamma | beta]
    # o_ref: (nb, E, ts) output pixels
    C = x_ref.shape[1]
    x = x_ref[...].astype(jnp.float32)                 # (nb, C, ts)

    # 1x1 conv == per-pixel channel contraction.  C (=4) is too small for the
    # MXU, so do it as C unrolled VPU broadcast-FMAs, accumulating in f32.
    y = p_ref[:, C:C + 1][None]                        # bias, (1, E, 1)
    for c in range(C):
        y = y + p_ref[:, c:c + 1][None] * x[:, c:c + 1, :]   # -> (nb, E, ts)

    # LayerNorm over the embedding axis (axis 1), matching torch.nn.LayerNorm
    # (biased variance, eps inside the sqrt).
    mean = jnp.mean(y, axis=1, keepdims=True)          # (nb, 1, ts)
    cen = y - mean
    var = jnp.mean(cen * cen, axis=1, keepdims=True)
    y_hat = cen * jax.lax.rsqrt(var + LN_EPS)

    g = p_ref[:, C + 1:C + 2][None]                    # (1, E, 1)
    beta = p_ref[:, C + 2:C + 3][None]                 # (1, E, 1)
    o_ref[...] = (y_hat * g + beta).astype(o_ref.dtype)


def _choose_ts(hw, max_ts):
    """Spatial (lane) tile: full HW if it fits, else a 128-multiple, preferring
    one that divides HW so every store is an unmasked, lane-dense vst."""
    if hw <= max_ts:
        return hw
    cap = max(128, (max_ts // 128) * 128)
    for t in range(cap, 127, -128):
        if hw % t == 0:
            return t
    return cap  # ragged last tile; Pallas masks the writeback (still correct)


def _largest_divisor_leq(n, limit):
    limit = max(1, min(n, limit))
    for d in range(limit, 0, -1):
        if n % d == 0:
            return d
    return 1


def band_embed(x_nchw, conv_w, conv_b, ln_g, ln_b, *, max_ts=32768,
               target_out_bytes_per_step=4 << 20):
    """x_nchw: (N, C, H, W)
       conv_w: (E, C) 1x1-conv weight (kernel dims squeezed), conv_b: (E,)
       ln_g, ln_b: (E,) LayerNorm affine params
       returns: (N, E, H, W), same dtype as x
    """
    N, C, H, W = x_nchw.shape
    E = conv_w.shape[0]
    HW = H * W
    out_itemsize = jnp.dtype(x_nchw.dtype).itemsize

    # --- tiling ------------------------------------------------------------
    ts = _choose_ts(HW, max_ts)
    if ts == HW:
        # Small/medium HW: batch several images per grid step so each step
        # moves enough bytes to amortize the ~0.35 us fixed per-step overhead.
        per_image_out = E * HW * out_itemsize
        nb_target = max(1, target_out_bytes_per_step // max(per_image_out, 1))
        nb = _largest_divisor_leq(N, nb_target)
    else:
        nb = 1
    n_blocks = N // nb
    s_blocks = pl.cdiv(HW, ts)

    # --- operands ------------------------------------------------------------
    x3 = x_nchw.reshape(N, C, HW)                        # free reshape (contiguous)
    params = jnp.concatenate(
        [conv_w.astype(jnp.float32),                     # (E, C)
         conv_b.astype(jnp.float32)[:, None],            # (E, 1)
         ln_g.astype(jnp.float32)[:, None],              # (E, 1)
         ln_b.astype(jnp.float32)[:, None]], axis=1)     # -> (E, C+3)

    # --- VMEM budget (explicit, generation-safe) -----------------------------
    tile_bytes = nb * ts * (C * x_nchw.dtype.itemsize + E * out_itemsize)
    vmem_bytes = 2 * tile_bytes + 2 * E * (C + 3) * 4 + (2 << 20)  # dbl-buf + params + headroom
    vmem_limit = int(min(max(vmem_bytes, 16 << 20), 48 << 20))

    M = N * HW
    cost = pl.CostEstimate(
        flops=2 * M * C * E + 8 * M * E,                 # conv + LN elementwise
        transcendentals=M,                               # rsqrt per pixel
        bytes_accessed=M * (C + E) * out_itemsize + E * (C + 3) * 4,
    )

    out3 = pl.pallas_call(
        band_embed_kernel,
        out_shape=jax.ShapeDtypeStruct((N, E, HW), x_nchw.dtype),
        grid_spec=pltpu.PrefetchScalarGridSpec(
            num_scalar_prefetch=0,
            grid=(n_blocks, s_blocks),
            in_specs=[
                pl.BlockSpec((nb, C, ts), lambda n, s: (n, 0, s)),   # input pixels
                pl.BlockSpec((E, C + 3), lambda n, s: (0, 0)),       # W|b|gamma|beta
            ],
            out_specs=pl.BlockSpec((nb, E, ts), lambda n, s: (n, 0, s)),
        ),
        compiler_params=pltpu.CompilerParams(
            dimension_semantics=("parallel", "parallel"),
            vmem_limit_bytes=vmem_limit),
        cost_estimate=cost,
    )(x3, params)

    return out3.reshape(N, E, H, W)                      # free reshape


def band_embed_ref(x_nchw, conv_w, conv_b, ln_g, ln_b):
    # Pure-JAX reference of the PyTorch forward.
    y = jnp.einsum('nchw,ec->nehw', x_nchw, conv_w) + conv_b[None, :, None, None]
    y = jnp.transpose(y, (0, 2, 3, 1))                       # NHWC
    mean = jnp.mean(y, axis=-1, keepdims=True)
    var = jnp.mean((y - mean) ** 2, axis=-1, keepdims=True)
    y = (y - mean) / jnp.sqrt(var + LN_EPS) * ln_g + ln_b
    return jnp.transpose(y, (0, 3, 1, 2))                    # NCHW


if __name__ == "__main__":
    # Small shapes consistent with the module: hsi_channels=4, hsi_embed_dim=32
    N, C, H, W, E = 2, 4, 16, 16, 32

    key = jax.random.PRNGKey(0)
    kx, kw, kb, kg, kbeta = jax.random.split(key, 5)

    x = jax.random.normal(kx, (N, C, H, W), dtype=jnp.float32)

    # Conv2d(C, E, 1) weight squeezed to (E, C); LayerNorm affine params.
    conv_w = jax.random.normal(kw, (E, C), dtype=jnp.float32) * 0.1
    conv_b = jax.random.normal(kb, (E,), dtype=jnp.float32) * 0.1
    ln_g = 1.0 + 0.05 * jax.random.normal(kg, (E,), dtype=jnp.float32)
    ln_b = 0.05 * jax.random.normal(kbeta, (E,), dtype=jnp.float32)

    out = band_embed(x, conv_w, conv_b, ln_g, ln_b)
    out = jax.block_until_ready(out)

    ref = band_embed_ref(x, conv_w, conv_b, ln_g, ln_b)
    assert out.shape == (N, E, H, W)
    assert jnp.allclose(out, ref, atol=1e-4, rtol=1e-4)

    print("KERNEL_OK")
</pallas_src>

<mosaic_0001>
module attributes {stable_mosaic.version = 11 : i64} {
  func.func @band_embed_kernel(%arg0: i32, %arg1: i32, %arg2: memref<2x4x256xf32, #tpu.memory_space<vmem>>, %arg3: memref<32x7xf32, #tpu.memory_space<vmem>>, %arg4: memref<2x32x256xf32, #tpu.memory_space<vmem>>) attributes {dimension_semantics = [#tpu.dimension_semantics<parallel>, #tpu.dimension_semantics<parallel>], iteration_bounds = array<i64: 1, 1>, scalar_prefetch = 0 : i64, scratch_operands = 0 : i64, tpu.core_type = #tpu.core_type<tc>, window_params = [{transform_indices = @transform_0, window_bounds = array<i64: 2, 4, 256>}, {pipeline_mode = #tpu.pipeline_mode<synchronous>, transform_indices = @transform_1, window_bounds = array<i64: 32, 7>}, {transform_indices = @transform_2, window_bounds = array<i64: 2, 32, 256>}]} {
    %c0 = arith.constant 0 : index
    %c0_0 = arith.constant 0 : index
    %c0_1 = arith.constant 0 : index
    %0 = vector.load %arg2[%c0, %c0_0, %c0_1] : memref<2x4x256xf32, #tpu.memory_space<vmem>>, vector<2x4x256xf32>
    %c0_2 = arith.constant 0 : index
    %c4 = arith.constant 4 : index
    %1 = vector.load %arg3[%c0_2, %c4] : memref<32x7xf32, #tpu.memory_space<vmem>>, vector<32x1xf32>
    %2 = vector.shape_cast %1 : vector<32x1xf32> to vector<1x32x1xf32>
    %c0_3 = arith.constant 0 : index
    %c0_4 = arith.constant 0 : index
    %3 = vector.load %arg3[%c0_3, %c0_4] : memref<32x7xf32, #tpu.memory_space<vmem>>, vector<32x1xf32>
    %4 = vector.shape_cast %3 : vector<32x1xf32> to vector<1x32x1xf32>
    %5 = vector.extract_strided_slice %0 {offsets = [0, 0, 0], sizes = [2, 1, 256], strides = [1, 1, 1]} : vector<2x4x256xf32> to vector<2x1x256xf32>
    %6 = vector.broadcast %4 : vector<1x32x1xf32> to vector<2x32x256xf32>
    %7 = vector.broadcast %5 : vector<2x1x256xf32> to vector<2x32x256xf32>
    %8 = arith.mulf %6, %7 : vector<2x32x256xf32>
    %9 = vector.broadcast %2 : vector<1x32x1xf32> to vector<2x32x256xf32>
    %10 = arith.addf %9, %8 : vector<2x32x256xf32>
    %c0_5 = arith.constant 0 : index
    %c1 = arith.constant 1 : index
    %11 = vector.load %arg3[%c0_5, %c1] : memref<32x7xf32, #tpu.memory_space<vmem>>, vector<32x1xf32>
    %12 = vector.shape_cast %11 : vector<32x1xf32> to vector<1x32x1xf32>
    %13 = vector.extract_strided_slice %0 {offsets = [0, 1, 0], sizes = [2, 1, 256], strides = [1, 1, 1]} : vector<2x4x256xf32> to vector<2x1x256xf32>
    %14 = vector.broadcast %12 : vector<1x32x1xf32> to vector<2x32x256xf32>
    %15 = vector.broadcast %13 : vector<2x1x256xf32> to vector<2x32x256xf32>
    %16 = arith.mulf %14, %15 : vector<2x32x256xf32>
    %17 = arith.addf %10, %16 : vector<2x32x256xf32>
    %c0_6 = arith.constant 0 : index
    %c2 = arith.constant 2 : index
    %18 = vector.load %arg3[%c0_6, %c2] : memref<32x7xf32, #tpu.memory_space<vmem>>, vector<32x1xf32>
    %19 = vector.shape_cast %18 : vector<32x1xf32> to vector<1x32x1xf32>
    %20 = vector.extract_strided_slice %0 {offsets = [0, 2, 0], sizes = [2, 1, 256], strides = [1, 1, 1]} : vector<2x4x256xf32> to vector<2x1x256xf32>
    %21 = vector.broadcast %19 : vector<1x32x1xf32> to vector<2x32x256xf32>
    %22 = vector.broadcast %20 : vector<2x1x256xf32> to vector<2x32x256xf32>
    %23 = arith.mulf %21, %22 : vector<2x32x256xf32>
    %24 = arith.addf %17, %23 : vector<2x32x256xf32>
    %c0_7 = arith.constant 0 : index
    %c3 = arith.constant 3 : index
    %25 = vector.load %arg3[%c0_7, %c3] : memref<32x7xf32, #tpu.memory_space<vmem>>, vector<32x1xf32>
    %26 = vector.shape_cast %25 : vector<32x1xf32> to vector<1x32x1xf32>
    %27 = vector.extract_strided_slice %0 {offsets = [0, 3, 0], sizes = [2, 1, 256], strides = [1, 1, 1]} : vector<2x4x256xf32> to vector<2x1x256xf32>
    %28 = vector.broadcast %26 : vector<1x32x1xf32> to vector<2x32x256xf32>
    %29 = vector.broadcast %27 : vector<2x1x256xf32> to vector<2x32x256xf32>
    %30 = arith.mulf %28, %29 : vector<2x32x256xf32>
    %31 = arith.addf %24, %30 : vector<2x32x256xf32>
    %cst = arith.constant dense<0.000000e+00> : vector<2x256xf32>
    %32 = vector.multi_reduction <add>, %31, %cst [1] : vector<2x32x256xf32> to vector<2x256xf32>
    %33 = vector.shape_cast %32 : vector<2x256xf32> to vector<2x1x256xf32>
    %cst_8 = arith.constant 3.200000e+01 : f32
    %34 = vector.broadcast %cst_8 : f32 to vector<2x1x256xf32>
    %35 = arith.divf %33, %34 : vector<2x1x256xf32>
    %36 = vector.broadcast %35 : vector<2x1x256xf32> to vector<2x32x256xf32>
    %37 = arith.subf %31, %36 : vector<2x32x256xf32>
    %38 = arith.mulf %37, %37 : vector<2x32x256xf32>
    %cst_9 = arith.constant dense<0.000000e+00> : vector<2x256xf32>
    %39 = vector.multi_reduction <add>, %38, %cst_9 [1] : vector<2x32x256xf32> to vector<2x256xf32>
    %40 = vector.shape_cast %39 : vector<2x256xf32> to vector<2x1x256xf32>
    %cst_10 = arith.constant 3.200000e+01 : f32
    %41 = vector.broadcast %cst_10 : f32 to vector<2x1x256xf32>
    %42 = arith.divf %40, %41 : vector<2x1x256xf32>
    %cst_11 = arith.constant 9.99999974E-6 : f32
    %43 = vector.broadcast %cst_11 : f32 to vector<2x1x256xf32>
    %44 = arith.addf %42, %43 : vector<2x1x256xf32>
    %45 = math.rsqrt %44 : vector<2x1x256xf32>
    %46 = vector.broadcast %45 : vector<2x1x256xf32> to vector<2x32x256xf32>
    %47 = arith.mulf %37, %46 : vector<2x32x256xf32>
    %c0_12 = arith.constant 0 : index
    %c5 = arith.constant 5 : index
    %48 = vector.load %arg3[%c0_12, %c5] : memref<32x7xf32, #tpu.memory_space<vmem>>, vector<32x1xf32>
    %49 = vector.shape_cast %48 : vector<32x1xf32> to vector<1x32x1xf32>
    %c0_13 = arith.constant 0 : index
    %c6 = arith.constant 6 : index
    %50 = vector.load %arg3[%c0_13, %c6] : memref<32x7xf32, #tpu.memory_space<vmem>>, vector<32x1xf32>
    %51 = vector.shape_cast %50 : vector<32x1xf32> to vector<1x32x1xf32>
    %52 = vector.broadcast %49 : vector<1x32x1xf32> to vector<2x32x256xf32>
    %53 = arith.mulf %47, %52 : vector<2x32x256xf32>
    %54 = vector.broadcast %51 : vector<1x32x1xf32> to vector<2x32x256xf32>
    %55 = arith.addf %53, %54 : vector<2x32x256xf32>
    %c0_14 = arith.constant 0 : index
    %c0_15 = arith.constant 0 : index
    %c0_16 = arith.constant 0 : index
    %56 = vector.load %arg4[%c0_14, %c0_15, %c0_16] : memref<2x32x256xf32, #tpu.memory_space<vmem>>, vector<2x32x256xf32>
    tpu.vector_store %arg4[%c0_14, %c0_15, %c0_16], %55 {strides = array<i32>} : memref<2x32x256xf32, #tpu.memory_space<vmem>>, vector<2x32x256xf32>,
    return
  }
  func.func @transform_0(%arg0: i32, %arg1: i32) -> (i32, i32, i32) {
    %c0_i32 = arith.constant 0 : i32
    %c0_i32_0 = arith.constant 0 : i32
    return %arg0, %c0_i32, %arg1 : i32, i32, i32
  }
  func.func @transform_1(%arg0: i32, %arg1: i32) -> (i32, i32) {
    %c0_i32 = arith.constant 0 : i32
    %c0_i32_0 = arith.constant 0 : i32
    %c0_i32_1 = arith.constant 0 : i32
    return %c0_i32, %c0_i32_0 : i32, i32
  }
  func.func @transform_2(%arg0: i32, %arg1: i32) -> (i32, i32, i32) {
    %c0_i32 = arith.constant 0 : i32
    %c0_i32_0 = arith.constant 0 : i32
    return %arg0, %c0_i32, %arg1 : i32, i32, i32
  }
}

</mosaic_0001>

<llo_original>
// kernel: tpu_custom_call.1
$region0: #{tpu_custom_call.1}
  #allocation0 [shape = 'u32[]', space=smem, size = 0x4, offset = 0x4, fixed_abs, tag = 'smem constant byte address 0x4 - core index']
  #allocation1 [shape = 'u32[144,128]{1,0:T(1,128)}', space=vmem, size = 0x12000, scoped, tag = 'internal scratch']
  %s0 = inlined_call_operand.vmem [shape: f32[2,4,256], index: 0, kind: input, shape index: {}]
  %s1 = inlined_call_operand.vmem [shape: f32[32,7], index: 1, kind: input, shape index: {}]
  %s2 = inlined_call_operand.hbm [shape: f32[2,32,256], index: 2, kind: output, shape index: {}]
  %s3 = sld [smem:[#allocation0]]
  $region18: #{tpu_custom_call.1} parent=0
    _
  %s5 = ssub.s32 1, %s3
  %s6 = scalar_select 0, %s5, %s3
  $region1: #{tpu_custom_call.1} parent=0
    #allocation2 [shape = 'u8[65536]{0}', space=vmem, size = 0x10000, scoped, tag = 'output window, operand 0, single buffered']
    #allocation3 [shape = 's32[1]{0}', space=sflag, size = 0x4, scoped, tag = 'scoped memory for tpu_custom_call.1']
    %7 = vsyncpa [#allocation3], 0
    // Predicated region
    $region2: #{tpu_custom_call.1} parent=1 // pred_check
      _
    $region3: #{tpu_custom_call.1} parent=1 // pred_check_branch
      %9 = sbr.rel (0) target = $region5
    $region4: #{tpu_custom_call.1} parent=1 // pred_region
      _
    $region5: #{tpu_custom_call.1} parent=1 // pred_fallthru
      _
    // Predicated region
    $region6: #{tpu_custom_call.1} parent=1 // pred_check
      _
    $region7: #{tpu_custom_call.1} parent=1 // pred_check_branch
      %11 = sbr.rel (0) target = $region9
    $region8: #{tpu_custom_call.1} parent=1 // pred_region
      _
    $region9: #{tpu_custom_call.1} parent=1 // pred_fallthru
      _
    %v12 = vld [vmem:[%s0] sm:$0xff]
    %v13 = vld [vmem:[%s0 + $0x8] sm:$0xff]
    %v14 = vld [vmem:[%s1] sm:$0xff]
    %v15 = vld [vmem:[%s1 + $0x8] sm:$0xff]
    %v16 = vld [vmem:[%s1 + $0x10] sm:$0xff]
    %v17 = vld [vmem:[%s1 + $0x18] sm:$0xff]
    %19 = vset.pattern.permute.xlu0 0
    %20 = vperm.xlu0 %19, %v14
    %v21 = vpop.permute.xlu0 %20
    %24 = vset.pattern.permute.xlu0 0
    %25 = vperm.xlu0 %24, %v15
    %v26 = vpop.permute.xlu0 %25
    %29 = vset.pattern.permute.xlu0 0
    %30 = vperm.xlu0 %29, %v16
    %v31 = vpop.permute.xlu0 %30
    %34 = vset.pattern.permute.xlu0 0
    %35 = vperm.xlu0 %34, %v17
    %v36 = vpop.permute.xlu0 %35
    %v40 = vlaneseq
    %v41 = vshrl.u32 %v40, 7
    %v42 = vsub.s32 0, %v41
    %v43 = vrot.slane %v12, %v42
    %v44 = vlaneseq
    %v45 = vshrl.u32 %v44, 7
    %v46 = vsub.s32 4, %v45
    %v47 = vrot.slane %v12, %v46
    %v48 = vlaneseq
    %v49 = vshrl.u32 %v48, 7
    %v50 = vsub.s32 0, %v49
    %v51 = vrot.slane %v13, %v50
    %v52 = vlaneseq
    %v53 = vshrl.u32 %v52, 7
    %v54 = vsub.s32 4, %v53
    %v55 = vrot.slane %v13, %v54
    %v60 = vlaneseq
    %v61 = vshrl.u32 %v60, 7
    %v62 = vsub.s32 0, %v61
    %v63 = vrot.slane %v43, %v62
    %v64 = vlaneseq
    %v65 = vshrl.u32 %v64, 7
    %v66 = vsub.s32 0, %v65
    %v67 = vrot.slane %v47, %v66
    %v68 = vlaneseq
    %v69 = vshrl.u32 %v68, 7
    %v70 = vsub.s32 0, %v69
    %v71 = vrot.slane %v51, %v70
    %v72 = vlaneseq
    %v73 = vshrl.u32 %v72, 7
    %v74 = vsub.s32 0, %v73
    %v75 = vrot.slane %v55, %v74
    %v76 = vmul.f32 %v21, %v63
    %v77 = vmul.f32 %v21, %v67
    %v78 = vmul.f32 %v26, %v63
    %v79 = vmul.f32 %v26, %v67
    %v80 = vmul.f32 %v31, %v63
    %v81 = vmul.f32 %v31, %v67
    %v82 = vmul.f32 %v36, %v63
    %v83 = vmul.f32 %v36, %v67
    %v84 = vmul.f32 %v21, %v71
    %v85 = vmul.f32 %v21, %v75
    %v86 = vmul.f32 %v26, %v71
    %v87 = vmul.f32 %v26, %v75
    %v88 = vmul.f32 %v31, %v71
    %v89 = vmul.f32 %v31, %v75
    %v90 = vmul.f32 %v36, %v71
    %v91 = vmul.f32 %v36, %v75
    %92 = vset.pattern.permute.xlu0 4
    %93 = vperm.xlu0 %92, %v14
    %v94 = vpop.permute.xlu0 %93
    %96 = vset.pattern.permute.xlu0 4
    %97 = vperm.xlu0 %96, %v15
    %v98 = vpop.permute.xlu0 %97
    %100 = vset.pattern.permute.xlu0 4
    %101 = vperm.xlu0 %100, %v16
    %v102 = vpop.permute.xlu0 %101
    %104 = vset.pattern.permute.xlu0 4
    %105 = vperm.xlu0 %104, %v17
    %v106 = vpop.permute.xlu0 %105
    %v108 = vadd.f32 %v94, %v76
    %v109 = vadd.f32 %v94, %v77
    %v110 = vadd.f32 %v98, %v78
    %v111 = vadd.f32 %v98, %v79
    %v112 = vadd.f32 %v102, %v80
    %v113 = vadd.f32 %v102, %v81
    %v114 = vadd.f32 %v106, %v82
    %v115 = vadd.f32 %v106, %v83
    %v116 = vadd.f32 %v94, %v84
    %v117 = vadd.f32 %v94, %v85
    %v118 = vadd.f32 %v98, %v86
    %v119 = vadd.f32 %v98, %v87
    %v120 = vadd.f32 %v102, %v88
    %v121 = vadd.f32 %v102, %v89
    %v122 = vadd.f32 %v106, %v90
    %v123 = vadd.f32 %v106, %v91
    %124 = vset.pattern.permute.xlu0 1
    %125 = vperm.xlu0 %124, %v14
    %v126 = vpop.permute.xlu0 %125
    %128 = vset.pattern.permute.xlu0 1
    %129 = vperm.xlu0 %128, %v15
    %v130 = vpop.permute.xlu0 %129
    %132 = vset.pattern.permute.xlu0 1
    %133 = vperm.xlu0 %132, %v16
    %v134 = vpop.permute.xlu0 %133
    %136 = vset.pattern.permute.xlu0 1
    %137 = vperm.xlu0 %136, %v17
    %v138 = vpop.permute.xlu0 %137
    %v140 = vlaneseq
    %v141 = vshrl.u32 %v140, 7
    %v142 = vsub.s32 1, %v141
    %v143 = vrot.slane %v12, %v142
    %v144 = vlaneseq
    %v145 = vshrl.u32 %v144, 7
    %v146 = vsub.s32 5, %v145
    %v147 = vrot.slane %v12, %v146
    %v148 = vlaneseq
    %v149 = vshrl.u32 %v148, 7
    %v150 = vsub.s32 1, %v149
    %v151 = vrot.slane %v13, %v150
    %v152 = vlaneseq
    %v153 = vshrl.u32 %v152, 7
    %v154 = vsub.s32 5, %v153
    %v155 = vrot.slane %v13, %v154
    %v160 = vlaneseq
    %v161 = vshrl.u32 %v160, 7
    %v162 = vsub.s32 1, %v161
    %v163 = vrot.slane %v143, %v162
    %v164 = vlaneseq
    %v165 = vshrl.u32 %v164, 7
    %v166 = vsub.s32 1, %v165
    %v167 = vrot.slane %v147, %v166
    %v168 = vlaneseq
    %v169 = vshrl.u32 %v168, 7
    %v170 = vsub.s32 1, %v169
    %v171 = vrot.slane %v151, %v170
    %v172 = vlaneseq
    %v173 = vshrl.u32 %v172, 7
    %v174 = vsub.s32 1, %v173
    %v175 = vrot.slane %v155, %v174
    %v176 = vmul.f32 %v126, %v163
    %v177 = vmul.f32 %v126, %v167
    %v178 = vmul.f32 %v130, %v163
    %v179 = vmul.f32 %v130, %v167
    %v180 = vmul.f32 %v134, %v163
    %v181 = vmul.f32 %v134, %v167
    %v182 = vmul.f32 %v138, %v163
    %v183 = vmul.f32 %v138, %v167
    %v184 = vmul.f32 %v126, %v171
    %v185 = vmul.f32 %v126, %v175
    %v186 = vmul.f32 %v130, %v171
    %v187 = vmul.f32 %v130, %v175
    %v188 = vmul.f32 %v134, %v171
    %v189 = vmul.f32 %v134, %v175
    %v190 = vmul.f32 %v138, %v171
    %v191 = vmul.f32 %v138, %v175
    %v192 = vadd.f32 %v108, %v176
    %v193 = vadd.f32 %v109, %v177
    %v194 = vadd.f32 %v110, %v178
    %v195 = vadd.f32 %v111, %v179
    %v196 = vadd.f32 %v112, %v180
    %v197 = vadd.f32 %v113, %v181
    %v198 = vadd.f32 %v114, %v182
    %v199 = vadd.f32 %v115, %v183
    %v200 = vadd.f32 %v116, %v184
    %v201 = vadd.f32 %v117, %v185
    %v202 = vadd.f32 %v118, %v186
    %v203 = vadd.f32 %v119, %v187
    %v204 = vadd.f32 %v120, %v188
    %v205 = vadd.f32 %v121, %v189
    %v206 = vadd.f32 %v122, %v190
    %v207 = vadd.f32 %v123, %v191
    %208 = vset.pattern.permute.xlu0 2
    %209 = vperm.xlu0 %208, %v14
    %v210 = vpop.permute.xlu0 %209
    %212 = vset.pattern.permute.xlu0 2
    %213 = vperm.xlu0 %212, %v15
    %v214 = vpop.permute.xlu0 %213
    %216 = vset.pattern.permute.xlu0 2
    %217 = vperm.xlu0 %216, %v16
    %v218 = vpop.permute.xlu0 %217
    %220 = vset.pattern.permute.xlu0 2
    %221 = vperm.xlu0 %220, %v17
    %v222 = vpop.permute.xlu0 %221
    %v224 = vlaneseq
    %v225 = vshrl.u32 %v224, 7
    %v226 = vsub.s32 2, %v225
    %v227 = vrot.slane %v12, %v226
    %v228 = vlaneseq
    %v229 = vshrl.u32 %v228, 7
    %v230 = vsub.s32 6, %v229
    %v231 = vrot.slane %v12, %v230
    %v232 = vlaneseq
    %v233 = vshrl.u32 %v232, 7
    %v234 = vsub.s32 2, %v233
    %v235 = vrot.slane %v13, %v234
    %v236 = vlaneseq
    %v237 = vshrl.u32 %v236, 7
    %v238 = vsub.s32 6, %v237
    %v239 = vrot.slane %v13, %v238
    %v244 = vlaneseq
    %v245 = vshrl.u32 %v244, 7
    %v246 = vsub.s32 2, %v245
    %v247 = vrot.slane %v227, %v246
    %v248 = vlaneseq
    %v249 = vshrl.u32 %v248, 7
    %v250 = vsub.s32 2, %v249
    %v251 = vrot.slane %v231, %v250
    %v252 = vlaneseq
    %v253 = vshrl.u32 %v252, 7
    %v254 = vsub.s32 2, %v253
    %v255 = vrot.slane %v235, %v254
    %v256 = vlaneseq
    %v257 = vshrl.u32 %v256, 7
    %v258 = vsub.s32 2, %v257
    %v259 = vrot.slane %v239, %v258
    %v260 = vmul.f32 %v210, %v247
    %v261 = vmul.f32 %v210, %v251
    %v262 = vmul.f32 %v214, %v247
    %v263 = vmul.f32 %v214, %v251
    %v264 = vmul.f32 %v218, %v247
    %v265 = vmul.f32 %v218, %v251
    %v266 = vmul.f32 %v222, %v247
    %v267 = vmul.f32 %v222, %v251
    %v268 = vmul.f32 %v210, %v255
    %v269 = vmul.f32 %v210, %v259
    %v270 = vmul.f32 %v214, %v255
    %v271 = vmul.f32 %v214, %v259
    %v272 = vmul.f32 %v218, %v255
    %v273 = vmul.f32 %v218, %v259
    %v274 = vmul.f32 %v222, %v255
    %v275 = vmul.f32 %v222, %v259
    %v276 = vadd.f32 %v192, %v260
    %v277 = vadd.f32 %v193, %v261
    %v278 = vadd.f32 %v194, %v262
    %v279 = vadd.f32 %v195, %v263
    %v280 = vadd.f32 %v196, %v264
    %v281 = vadd.f32 %v197, %v265
    %v282 = vadd.f32 %v198, %v266
    %v283 = vadd.f32 %v199, %v267
    %v284 = vadd.f32 %v200, %v268
    %v285 = vadd.f32 %v201, %v269
    %v286 = vadd.f32 %v202, %v270
    %v287 = vadd.f32 %v203, %v271
    %v288 = vadd.f32 %v204, %v272
    %v289 = vadd.f32 %v205, %v273
    %v290 = vadd.f32 %v206, %v274
    %v291 = vadd.f32 %v207, %v275
    %292 = vset.pattern.permute.xlu0 3
    %293 = vperm.xlu0 %292, %v14
    %v294 = vpop.permute.xlu0 %293
    %296 = vset.pattern.permute.xlu0 3
    %297 = vperm.xlu0 %296, %v15
    %v298 = vpop.permute.xlu0 %297
    %300 = vset.pattern.permute.xlu0 3
    %301 = vperm.xlu0 %300, %v16
    %v302 = vpop.permute.xlu0 %301
    %304 = vset.pattern.permute.xlu0 3
    %305 = vperm.xlu0 %304, %v17
    %v306 = vpop.permute.xlu0 %305
    %v308 = vlaneseq
    %v309 = vshrl.u32 %v308, 7
    %v310 = vsub.s32 3, %v309
    %v311 = vrot.slane %v12, %v310
    %v312 = vlaneseq
    %v313 = vshrl.u32 %v312, 7
    %v314 = vsub.s32 7, %v313
    %v315 = vrot.slane %v12, %v314
    %v316 = vlaneseq
    %v317 = vshrl.u32 %v316, 7
    %v318 = vsub.s32 3, %v317
    %v319 = vrot.slane %v13, %v318
    %v320 = vlaneseq
    %v321 = vshrl.u32 %v320, 7
    %v322 = vsub.s32 7, %v321
    %v323 = vrot.slane %v13, %v322
    %v328 = vlaneseq
    %v329 = vshrl.u32 %v328, 7
    %v330 = vsub.s32 3, %v329
    %v331 = vrot.slane %v311, %v330
    %v332 = vlaneseq
    %v333 = vshrl.u32 %v332, 7
    %v334 = vsub.s32 3, %v333
    %v335 = vrot.slane %v315, %v334
    %v336 = vlaneseq
    %v337 = vshrl.u32 %v336, 7
    %v338 = vsub.s32 3, %v337
    %v339 = vrot.slane %v319, %v338
    %v340 = vlaneseq
    %v341 = vshrl.u32 %v340, 7
    %v342 = vsub.s32 3, %v341
    %v343 = vrot.slane %v323, %v342
    %v344 = vmul.f32 %v294, %v331
    %v345 = vmul.f32 %v294, %v335
    %v346 = vmul.f32 %v298, %v331
    %v347 = vmul.f32 %v298, %v335
    %v348 = vmul.f32 %v302, %v331
    %v349 = vmul.f32 %v302, %v335
    %v350 = vmul.f32 %v306, %v331
    %v351 = vmul.f32 %v306, %v335
    %v352 = vmul.f32 %v294, %v339
    %v353 = vmul.f32 %v294, %v343
    %v354 = vmul.f32 %v298, %v339
    %v355 = vmul.f32 %v298, %v343
    %v356 = vmul.f32 %v302, %v339
    %v357 = vmul.f32 %v302, %v343
    %v358 = vmul.f32 %v306, %v339
    %v359 = vmul.f32 %v306, %v343
    %v360 = vadd.f32 %v276, %v344
    %v361 = vadd.f32 %v277, %v345
    %v362 = vadd.f32 %v278, %v346
    %v363 = vadd.f32 %v279, %v347
    %v364 = vadd.f32 %v280, %v348
    %v365 = vadd.f32 %v281, %v349
    %v366 = vadd.f32 %v282, %v350
    %v367 = vadd.f32 %v283, %v351
    %v368 = vadd.f32 %v284, %v352
    %v369 = vadd.f32 %v285, %v353
    %v370 = vadd.f32 %v286, %v354
    %v371 = vadd.f32 %v287, %v355
    %v372 = vadd.f32 %v288, %v356
    %v373 = vadd.f32 %v289, %v357
    %v374 = vadd.f32 %v290, %v358
    %v375 = vadd.f32 %v291, %v359
    %v376 = vadd.f32 %v360, %v362
    %v377 = vadd.f32 %v376, %v364
    %v378 = vadd.f32 %v377, %v366
    %v379 = vrot.slane %v378, 4
    %v380 = vadd.f32 %v378, %v379
    %v381 = vrot.slane %v380, 2
    %v382 = vadd.f32 %v380, %v381
    %v383 = vrot.slane %v382, 1
    %v384 = vadd.f32 %v382, %v383
    %v385 = vadd.f32 %v361, %v363
    %v386 = vadd.f32 %v385, %v365
    %v387 = vadd.f32 %v386, %v367
    %v388 = vrot.slane %v387, 4
    %v389 = vadd.f32 %v387, %v388
    %v390 = vrot.slane %v389, 2
    %v391 = vadd.f32 %v389, %v390
    %v392 = vrot.slane %v391, 1
    %v393 = vadd.f32 %v391, %v392
    %v394 = vadd.f32 %v368, %v370
    %v395 = vadd.f32 %v394, %v372
    %v396 = vadd.f32 %v395, %v374
    %v397 = vrot.slane %v396, 4
    %v398 = vadd.f32 %v396, %v397
    %v399 = vrot.slane %v398, 2
    %v400 = vadd.f32 %v398, %v399
    %v401 = vrot.slane %v400, 1
    %v402 = vadd.f32 %v400, %v401
    %v403 = vadd.f32 %v369, %v371
    %v404 = vadd.f32 %v403, %v373
    %v405 = vadd.f32 %v404, %v375
    %v406 = vrot.slane %v405, 4
    %v407 = vadd.f32 %v405, %v406
    %v408 = vrot.slane %v407, 2
    %v409 = vadd.f32 %v407, %v408
    %v410 = vrot.slane %v409, 1
    %v411 = vadd.f32 %v409, %v410
    %v412 = vrcp.pop 32.0
    %v413 = vmul.f32 %v384, %v412
    %v414 = vmul.f32 %v393, %v412
    %v415 = vmul.f32 %v402, %v412
    %v416 = vmul.f32 %v411, %v412
    %v417 = vsub.f32 %v360, %v413
    %v418 = vsub.f32 %v361, %v414
    %v419 = vsub.f32 %v362, %v413
    %v420 = vsub.f32 %v363, %v414
    %v421 = vsub.f32 %v364, %v413
    %v422 = vsub.f32 %v365, %v414
    %v423 = vsub.f32 %v366, %v413
    %v424 = vsub.f32 %v367, %v414
    %v425 = vsub.f32 %v368, %v415
    %v426 = vsub.f32 %v369, %v416
    %v427 = vsub.f32 %v370, %v415
    %v428 = vsub.f32 %v371, %v416
    %v429 = vsub.f32 %v372, %v415
    %v430 = vsub.f32 %v373, %v416
    %v431 = vsub.f32 %v374, %v415
    %v432 = vsub.f32 %v375, %v416
    %v433 = vmul.f32 %v417, %v417
    %v434 = vmul.f32 %v418, %v418
    %v435 = vmul.f32 %v419, %v419
    %v436 = vmul.f32 %v420, %v420
    %v437 = vmul.f32 %v421, %v421
    %v438 = vmul.f32 %v422, %v422
    %v439 = vmul.f32 %v423, %v423
    %v440 = vmul.f32 %v424, %v424
    %v441 = vmul.f32 %v425, %v425
    %v442 = vmul.f32 %v426, %v426
    %v443 = vmul.f32 %v427, %v427
    %v444 = vmul.f32 %v428, %v428
    %v445 = vmul.f32 %v429, %v429
    %v446 = vmul.f32 %v430, %v430
    %v447 = vmul.f32 %v431, %v431
    %v448 = vmul.f32 %v432, %v432
    %v449 = vadd.f32 %v433, %v435
    %v450 = vadd.f32 %v449, %v437
    %v451 = vadd.f32 %v450, %v439
    %v452 = vrot.slane %v451, 4
    %v453 = vadd.f32 %v451, %v452
    %v454 = vrot.slane %v453, 2
    %v455 = vadd.f32 %v453, %v454
    %v456 = vrot.slane %v455, 1
    %v457 = vadd.f32 %v455, %v456
    %v458 = vadd.f32 %v434, %v436
    %v459 = vadd.f32 %v458, %v438
    %v460 = vadd.f32 %v459, %v440
    %v461 = vrot.slane %v460, 4
    %v462 = vadd.f32 %v460, %v461
    %v463 = vrot.slane %v462, 2
    %v464 = vadd.f32 %v462, %v463
    %v465 = vrot.slane %v464, 1
    %v466 = vadd.f32 %v464, %v465
    %v467 = vadd.f32 %v441, %v443
    %v468 = vadd.f32 %v467, %v445
    %v469 = vadd.f32 %v468, %v447
    %v470 = vrot.slane %v469, 4
    %v471 = vadd.f32 %v469, %v470
    %v472 = vrot.slane %v471, 2
    %v473 = vadd.f32 %v471, %v472
    %v474 = vrot.slane %v473, 1
    %v475 = vadd.f32 %v473, %v474
    %v476 = vadd.f32 %v442, %v444
    %v477 = vadd.f32 %v476, %v446
    %v478 = vadd.f32 %v477, %v448
    %v479 = vrot.slane %v478, 4
    %v480 = vadd.f32 %v478, %v479
    %v481 = vrot.slane %v480, 2
    %v482 = vadd.f32 %v480, %v481
    %v483 = vrot.slane %v482, 1
    %v484 = vadd.f32 %v482, %v483
    %v485 = vmul.f32 %v457, %v412
    %v486 = vmul.f32 %v466, %v412
    %v487 = vmul.f32 %v475, %v412
    %v488 = vmul.f32 %v484, %v412
    %v489 = vadd.f32 %v485, 1e-05
    %v490 = vadd.f32 %v486, 1e-05
    %v491 = vadd.f32 %v487, 1e-05
    %v492 = vadd.f32 %v488, 1e-05
    %v493 = vrsqrt.pop %v489
    %v494 = vrsqrt.pop %v490
    %v495 = vrsqrt.pop %v491
    %v496 = vrsqrt.pop %v492
    %v497 = vmul.f32 %v417, %v493
    %v498 = vmul.f32 %v418, %v494
    %v499 = vmul.f32 %v419, %v493
    %v500 = vmul.f32 %v420, %v494
    %v501 = vmul.f32 %v421, %v493
    %v502 = vmul.f32 %v422, %v494
    %v503 = vmul.f32 %v423, %v493
    %v504 = vmul.f32 %v424, %v494
    %v505 = vmul.f32 %v425, %v495
    %v506 = vmul.f32 %v426, %v496
    %v507 = vmul.f32 %v427, %v495
    %v508 = vmul.f32 %v428, %v496
    %v509 = vmul.f32 %v429, %v495
    %v510 = vmul.f32 %v430, %v496
    %v511 = vmul.f32 %v431, %v495
    %v512 = vmul.f32 %v432, %v496
    %513 = vset.pattern.permute.xlu0 5
    %514 = vperm.xlu0 %513, %v14
    %v515 = vpop.permute.xlu0 %514
    %517 = vset.pattern.permute.xlu0 5
    %518 = vperm.xlu0 %517, %v15
    %v519 = vpop.permute.xlu0 %518
    %521 = vset.pattern.permute.xlu0 5
    %522 = vperm.xlu0 %521, %v16
    %v523 = vpop.permute.xlu0 %522
    %525 = vset.pattern.permute.xlu0 5
    %526 = vperm.xlu0 %525, %v17
    %v527 = vpop.permute.xlu0 %526
    %v529 = vmul.f32 %v497, %v515
    %v530 = vmul.f32 %v498, %v515
    %v531 = vmul.f32 %v499, %v519
    %v532 = vmul.f32 %v500, %v519
    %v533 = vmul.f32 %v501, %v523
    %v534 = vmul.f32 %v502, %v523
    %v535 = vmul.f32 %v503, %v527
    %v536 = vmul.f32 %v504, %v527
    %v537 = vmul.f32 %v505, %v515
    %v538 = vmul.f32 %v506, %v515
    %v539 = vmul.f32 %v507, %v519
    %v540 = vmul.f32 %v508, %v519
    %v541 = vmul.f32 %v509, %v523
    %v542 = vmul.f32 %v510, %v523
    %v543 = vmul.f32 %v511, %v527
    %v544 = vmul.f32 %v512, %v527
    %545 = vset.pattern.permute.xlu0 6
    %546 = vperm.xlu0 %545, %v14
    %v547 = vpop.permute.xlu0 %546
    %549 = vset.pattern.permute.xlu0 6
    %550 = vperm.xlu0 %549, %v15
    %v551 = vpop.permute.xlu0 %550
    %553 = vset.pattern.permute.xlu0 6
    %554 = vperm.xlu0 %553, %v16
    %v555 = vpop.permute.xlu0 %554
    %557 = vset.pattern.permute.xlu0 6
    %558 = vperm.xlu0 %557, %v17
    %v559 = vpop.permute.xlu0 %558
    %v561 = vadd.f32 %v529, %v547
    %v562 = vadd.f32 %v530, %v547
    %v563 = vadd.f32 %v531, %v551
    %v564 = vadd.f32 %v532, %v551
    %v565 = vadd.f32 %v533, %v555
    %v566 = vadd.f32 %v534, %v555
    %v567 = vadd.f32 %v535, %v559
    %v568 = vadd.f32 %v536, %v559
    %v569 = vadd.f32 %v537, %v547
    %v570 = vadd.f32 %v538, %v547
    %v571 = vadd.f32 %v539, %v551
    %v572 = vadd.f32 %v540, %v551
    %v573 = vadd.f32 %v541, %v555
    %v574 = vadd.f32 %v542, %v555
    %v575 = vadd.f32 %v543, %v559
    %v576 = vadd.f32 %v544, %v559
    %577 = vst [vmem:[#allocation2] sm:$0xff] %v561
    %578 = vst [vmem:[#allocation2 + $0x8] sm:$0xff] %v562
    %579 = vst [vmem:[#allocation2 + $0x10] sm:$0xff] %v563
    %580 = vst [vmem:[#allocation2 + $0x18] sm:$0xff] %v564
    %581 = vst [vmem:[#allocation2 + $0x20] sm:$0xff] %v565
    %582 = vst [vmem:[#allocation2 + $0x28] sm:$0xff] %v566
    %583 = vst [vmem:[#allocation2 + $0x30] sm:$0xff] %v567
    %584 = vst [vmem:[#allocation2 + $0x38] sm:$0xff] %v568
    %585 = vst [vmem:[#allocation2 + $0x40] sm:$0xff] %v569
    %586 = vst [vmem:[#allocation2 + $0x48] sm:$0xff] %v570
    %587 = vst [vmem:[#allocation2 + $0x50] sm:$0xff] %v571
    %588 = vst [vmem:[#allocation2 + $0x58] sm:$0xff] %v572
    %589 = vst [vmem:[#allocation2 + $0x60] sm:$0xff] %v573
    %590 = vst [vmem:[#allocation2 + $0x68] sm:$0xff] %v574
    %591 = vst [vmem:[#allocation2 + $0x70] sm:$0xff] %v575
    %592 = vst [vmem:[#allocation2 + $0x78] sm:$0xff] %v576
    // Predicated region
    $region10: #{tpu_custom_call.1} parent=1 // pred_check
      _
    $region11: #{tpu_custom_call.1} parent=1 // pred_check_branch
      %594 = sbr.rel (0) target = $region13
    $region12: #{tpu_custom_call.1} parent=1 // pred_region
      %s596 = ssub.s32 2048, 2048
      %597 = vsyncadd [#allocation3], %s596
      %s598 = sshll.u32 [#allocation2], 4
      %s599 = int_to_ptr.vmem [resolvable:$true] %s598
      %604 = dma.vmem_to_hbm [thread:$0]  %s599, 2048, %s2, [#allocation3], 256, 256, 16
    $region13: #{tpu_custom_call.1} parent=1 // pred_fallthru
      _
    // Predicated region
    $region14: #{tpu_custom_call.1} parent=1 // pred_check
      _
    $region15: #{tpu_custom_call.1} parent=1 // pred_check_branch
      %606 = sbr.rel (0) target = $region17
    $region16: #{tpu_custom_call.1} parent=1 // pred_region
      %607 = dma.done [#allocation3], 2048
    $region17: #{tpu_custom_call.1} parent=1 // pred_fallthru
      _
    %608 = vsyncpa [#allocation3], 1

</llo_original>
